<compile_context>
chip_gen: v7x
topology: tpu7x:2x2x1
jax: 0.10.0
libtpu: 0.0.40
codegen_flags: <defaults>
</compile_context>

<pallas_src>
import functools

import jax
import jax.numpy as jnp
from jax.experimental import pallas as pl
from jax.experimental.pallas import tpu as pltpu


def _round_up(n, m):
    return ((n + m - 1) // m) * m


# ---------------------------------------------------------------------------
# Kernel 1: hoisted input projection  gates_x = x2d @ W_ih + b
# ---------------------------------------------------------------------------
def _input_proj_kernel(x_ref, wih_ref, b_ref, gx_ref):
    gx_ref[...] = (
        jnp.dot(x_ref[...], wih_ref[...], preferred_element_type=jnp.float32)
        + b_ref[...]
    )


# ---------------------------------------------------------------------------
# Kernel 2: the recurrence.  Only h_prev @ W_hh + elementwise per step.
# ---------------------------------------------------------------------------
def _lstm_recurrence_kernel(gx_ref, whh_ref, hseq_ref, clast_ref,
                            h_sc, c_sc, *, t_blk, b_pad, h_pad):
    tb = pl.program_id(0)

    # h0 = c0 = 0, matching the PyTorch module when h/c are not provided.
    @pl.when(tb == 0)
    def _():
        h_sc[...] = jnp.zeros_like(h_sc)
        c_sc[...] = jnp.zeros_like(c_sc)

    H = h_pad
    w_hh = whh_ref[...]          # resident for the whole block
    h = h_sc[...]
    c = c_sc[...]

    # Statically unrolled time loop: static row offsets -> aligned, unmasked
    # vector loads/stores; full cross-step visibility for the scheduler.
    for t in range(t_blk):
        row = t * b_pad
        gates = (
            gx_ref[pl.ds(row, b_pad), :]
            + jnp.dot(h, w_hh, preferred_element_type=jnp.float32)
        )
        # One fused sigmoid over the contiguous f|i|o slab, one tanh for g.
        sig = jax.nn.sigmoid(gates[:, : 3 * H])
        f_gate = sig[:, 0 * H:1 * H]
        i_gate = sig[:, 1 * H:2 * H]
        o_gate = sig[:, 2 * H:3 * H]
        g_gate = jnp.tanh(gates[:, 3 * H:])

        c = f_gate * c + i_gate * g_gate
        h = o_gate * jnp.tanh(c)
        hseq_ref[pl.ds(row, b_pad), :] = h

    # Carry the running state to the next time block.
    h_sc[...] = h
    c_sc[...] = c

    # Final cell state: written once, on the last grid block only.
    @pl.when(tb == pl.num_programs(0) - 1)
    def _():
        clast_ref[...] = c


# ---------------------------------------------------------------------------
# Wrapper
# ---------------------------------------------------------------------------
def lstm_pallas(x, w_ih, w_hh, b, hidden_size, *, t_blk=None):
    """x: (S, B, I) f32; w_ih: (I, 4H); w_hh: (H, 4H); b: (1, 4H).

    Returns (h_seq, (h_last, c_last)) with the same shapes as the module:
      h_seq (S, B, H), h_last (1, B, H), c_last (1, B, H).
    """
    S, B, I = x.shape
    H = hidden_size
    assert w_ih.shape == (I, 4 * H)
    assert w_hh.shape == (H, 4 * H)
    assert b.shape == (1, 4 * H)

    # Hardware-friendly padded sizes: sublane (8) on batch, lane (128) on
    # feature axes; each gate gets its own lane-aligned H_pad slab.
    B_pad = _round_up(B, 8)
    H_pad = _round_up(H, 128)
    I_pad = _round_up(I, 128)
    G_pad = 4 * H_pad

    if t_blk is None:
        t_blk = S                      # whole sequence in one grid step
    assert S % t_blk == 0
    n_tblocks = S // t_blk

    f32 = jnp.float32

    # --- pad / fuse parameters (gate order f, i, o, g) ---------------------
    def pad_gate_weight(w, in_dim, in_pad):
        out = jnp.zeros((in_pad, G_pad), f32)
        for g in range(4):
            out = out.at[:in_dim, g * H_pad:g * H_pad + H].set(
                w[:, g * H:(g + 1) * H])
        return out

    w_ih_p = pad_gate_weight(w_ih, I, I_pad)          # (I_pad, 4*H_pad)
    w_hh_p = pad_gate_weight(w_hh, H, H_pad)          # (H_pad, 4*H_pad)
    b_p = jnp.zeros((1, G_pad), f32)
    for g in range(4):
        b_p = b_p.at[0, g * H_pad:g * H_pad + H].set(b[0, g * H:(g + 1) * H])

    # --- pad x and flatten to a lane-dense 2D slab (rows = S * B_pad) ------
    x_p = jnp.zeros((S, B_pad, I_pad), f32).at[:, :B, :I].set(x)
    x2d = x_p.reshape(S * B_pad, I_pad)
    rows_blk = t_blk * B_pad

    # --- pass 1: one big input projection (no time dependence) -------------
    gates_x = pl.pallas_call(
        _input_proj_kernel,
        out_shape=jax.ShapeDtypeStruct((S * B_pad, G_pad), f32),
        grid=(n_tblocks,),
        in_specs=[
            pl.BlockSpec((rows_blk, I_pad), lambda r: (r, 0)),   # x rows
            pl.BlockSpec((I_pad, G_pad), lambda r: (0, 0)),      # W_ih
            pl.BlockSpec((1, G_pad), lambda r: (0, 0)),          # bias
        ],
        out_specs=pl.BlockSpec((rows_blk, G_pad), lambda r: (r, 0)),
        compiler_params=pltpu.CompilerParams(
            dimension_semantics=("parallel",),      # row blocks independent
        ),
    )(x2d, w_ih_p, b_p)

    # --- pass 2: the serial recurrence --------------------------------------
    kernel = functools.partial(
        _lstm_recurrence_kernel, t_blk=t_blk, b_pad=B_pad, h_pad=H_pad)

    h_seq2d, c_last_p = pl.pallas_call(
        kernel,
        out_shape=(
            jax.ShapeDtypeStruct((S * B_pad, H_pad), f32),   # h_seq (flat)
            jax.ShapeDtypeStruct((B_pad, H_pad), f32),       # final c
        ),
        grid_spec=pltpu.PrefetchScalarGridSpec(
            num_scalar_prefetch=0,
            grid=(n_tblocks,),
            in_specs=[
                pl.BlockSpec((rows_blk, G_pad), lambda tb: (tb, 0)),  # gates_x
                pl.BlockSpec((H_pad, G_pad), lambda tb: (0, 0)),      # W_hh
            ],
            out_specs=[
                pl.BlockSpec((rows_blk, H_pad), lambda tb: (tb, 0)),  # h_seq
                pl.BlockSpec((B_pad, H_pad), lambda tb: (0, 0)),      # final c
            ],
            scratch_shapes=[
                pltpu.VMEM((B_pad, H_pad), f32),   # running h
                pltpu.VMEM((B_pad, H_pad), f32),   # running c
            ],
        ),
        compiler_params=pltpu.CompilerParams(
            dimension_semantics=("arbitrary",),    # sequential recurrence
        ),
    )(gates_x, w_hh_p)

    # --- unpad --------------------------------------------------------------
    h_seq = h_seq2d.reshape(S, B_pad, H_pad)[:, :B, :H]
    h_last = h_seq[-1:]                                  # (1, B, H)
    c_last = c_last_p[:B, :H][None]                      # (1, B, H)
    return h_seq, (h_last, c_last)


# ---------------------------------------------------------------------------
# Pure-JAX reference (replicates the PyTorch forward exactly)
# ---------------------------------------------------------------------------
def lstm_reference(x, w_ih, w_hh, b, hidden_size):
    S, B, I = x.shape
    H = hidden_size

    def step(carry, x_t):
        h, c = carry
        gates = x_t @ w_ih + h @ w_hh + b          # (B, 4H)
        f = jax.nn.sigmoid(gates[:, 0 * H:1 * H])
        i = jax.nn.sigmoid(gates[:, 1 * H:2 * H])
        o = jax.nn.sigmoid(gates[:, 2 * H:3 * H])
        g = jnp.tanh(gates[:, 3 * H:4 * H])
        c_new = f * c + i * g
        h_new = o * jnp.tanh(c_new)
        return (h_new, c_new), h_new

    h0 = jnp.zeros((B, H), jnp.float32)
    c0 = jnp.zeros((B, H), jnp.float32)
    (h_f, c_f), h_seq = jax.lax.scan(step, (h0, c0), x)
    return h_seq, (h_f[None], c_f[None])


def init_params(key, input_size, hidden_size):
    """Deterministic init mirroring the 8 nn.Linear layers of the module.

    W_ih = concat over gates of (I, H) -> (I, 4H); W_hh likewise (H, 4H);
    b = (bias_input + bias_hidden) per gate -> (1, 4H). Gate order: f, i, o, g.
    """
    I, H = input_size, hidden_size
    keys = jax.random.split(key, 16)
    bound_i = 1.0 / jnp.sqrt(I)
    bound_h = 1.0 / jnp.sqrt(H)

    w_i_list, w_h_list, b_list = [], [], []
    for g in range(4):  # f, i, o, g
        w_i = jax.random.uniform(keys[4 * g + 0], (I, H), jnp.float32,
                                 -bound_i, bound_i)
        b_i = jax.random.uniform(keys[4 * g + 1], (H,), jnp.float32,
                                 -bound_i, bound_i)
        w_h = jax.random.uniform(keys[4 * g + 2], (H, H), jnp.float32,
                                 -bound_h, bound_h)
        b_h = jax.random.uniform(keys[4 * g + 3], (H,), jnp.float32,
                                 -bound_h, bound_h)
        w_i_list.append(w_i)
        w_h_list.append(w_h)
        b_list.append(b_i + b_h)

    w_ih = jnp.concatenate(w_i_list, axis=1)            # (I, 4H)
    w_hh = jnp.concatenate(w_h_list, axis=1)            # (H, 4H)
    b = jnp.concatenate(b_list, axis=0)[None, :]        # (1, 4H)
    return w_ih, w_hh, b


if __name__ == "__main__":
    seq_len, batch_size, input_size, hidden_size = 8, 2, 4, 32

    key = jax.random.PRNGKey(0)
    k_x, k_p = jax.random.split(key)
    x = jax.random.normal(k_x, (seq_len, batch_size, input_size), jnp.float32)
    w_ih, w_hh, b = init_params(k_p, input_size, hidden_size)

    h_seq, (h_last, c_last) = jax.block_until_ready(
        lstm_pallas(x, w_ih, w_hh, b, hidden_size))

    h_seq_ref, (h_ref, c_ref) = lstm_reference(x, w_ih, w_hh, b, hidden_size)

    assert h_seq.shape == (seq_len, batch_size, hidden_size)
    assert h_last.shape == (1, batch_size, hidden_size)
    assert c_last.shape == (1, batch_size, hidden_size)
    assert jnp.allclose(h_seq, h_seq_ref, atol=1e-5, rtol=1e-5)
    assert jnp.allclose(h_last, h_ref, atol=1e-5, rtol=1e-5)
    assert jnp.allclose(c_last, c_ref, atol=1e-5, rtol=1e-5)

    print("KERNEL_OK")
</pallas_src>

<mosaic_0001>
module attributes {stable_mosaic.version = 11 : i64} {
  func.func @_input_proj_kernel(%arg0: i32, %arg1: memref<64x128xf32, #tpu.memory_space<vmem>>, %arg2: memref<128x512xf32, #tpu.memory_space<vmem>>, %arg3: memref<1x512xf32, #tpu.memory_space<vmem>>, %arg4: memref<64x512xf32, #tpu.memory_space<vmem>>) attributes {dimension_semantics = [#tpu.dimension_semantics<parallel>], iteration_bounds = array<i64: 1>, scalar_prefetch = 0 : i64, scratch_operands = 0 : i64, tpu.core_type = #tpu.core_type<tc>, window_params = [{transform_indices = @transform_0, window_bounds = array<i64: 64, 128>}, {pipeline_mode = #tpu.pipeline_mode<synchronous>, transform_indices = @transform_1, window_bounds = array<i64: 128, 512>}, {pipeline_mode = #tpu.pipeline_mode<synchronous>, transform_indices = @transform_2, window_bounds = array<i64: 1, 512>}, {transform_indices = @transform_3, window_bounds = array<i64: 64, 512>}]} {
    %c0 = arith.constant 0 : index
    %c0_0 = arith.constant 0 : index
    %0 = vector.load %arg1[%c0, %c0_0] : memref<64x128xf32, #tpu.memory_space<vmem>>, vector<64x128xf32>
    %c0_1 = arith.constant 0 : index
    %c0_2 = arith.constant 0 : index
    %1 = vector.load %arg2[%c0_1, %c0_2] : memref<128x512xf32, #tpu.memory_space<vmem>>, vector<128x512xf32>
    %cst = arith.constant dense<0.000000e+00> : vector<64x512xf32>
    %2 = tpu.matmul %0, %1, %cst {dimension_numbers = #tpu.dot_dimension_numbers<[1], [0], [0], [1], [0, 0, 1, 1], [], []>} : vector<64x128xf32>, vector<128x512xf32>, vector<64x512xf32> -> vector<64x512xf32>
    %c0_3 = arith.constant 0 : index
    %c0_4 = arith.constant 0 : index
    %3 = vector.load %arg3[%c0_3, %c0_4] : memref<1x512xf32, #tpu.memory_space<vmem>>, vector<1x512xf32>
    %4 = vector.broadcast %3 : vector<1x512xf32> to vector<64x512xf32>
    %5 = arith.addf %2, %4 : vector<64x512xf32>
    %c0_5 = arith.constant 0 : index
    %c0_6 = arith.constant 0 : index
    %6 = vector.load %arg4[%c0_5, %c0_6] : memref<64x512xf32, #tpu.memory_space<vmem>>, vector<64x512xf32>
    tpu.vector_store %arg4[%c0_5, %c0_6], %5 {strides = array<i32>} : memref<64x512xf32, #tpu.memory_space<vmem>>, vector<64x512xf32>,
    return
  }
  func.func @transform_0(%arg0: i32) -> (i32, i32) {
    %c0_i32 = arith.constant 0 : i32
    %c0_i32_0 = arith.constant 0 : i32
    return %arg0, %c0_i32 : i32, i32
  }
  func.func @transform_1(%arg0: i32) -> (i32, i32) {
    %c0_i32 = arith.constant 0 : i32
    %c0_i32_0 = arith.constant 0 : i32
    %c0_i32_1 = arith.constant 0 : i32
    return %c0_i32, %c0_i32_0 : i32, i32
  }
  func.func @transform_2(%arg0: i32) -> (i32, i32) {
    %c0_i32 = arith.constant 0 : i32
    %c0_i32_0 = arith.constant 0 : i32
    %c0_i32_1 = arith.constant 0 : i32
    return %c0_i32, %c0_i32_0 : i32, i32
  }
  func.func @transform_3(%arg0: i32) -> (i32, i32) {
    %c0_i32 = arith.constant 0 : i32
    %c0_i32_0 = arith.constant 0 : i32
    return %arg0, %c0_i32 : i32, i32
  }
}

</mosaic_0001>

<llo_original>
// kernel: tpu_custom_call.1
$region0: #{tpu_custom_call.1}
  #allocation0 [shape = 'u32[]', space=smem, size = 0x4, offset = 0x4, fixed_abs, tag = 'smem constant byte address 0x4 - core index']
  #allocation1 [shape = 'u32[144,128]{1,0:T(1,128)}', space=vmem, size = 0x12000, scoped, tag = 'internal scratch']
  %s0 = inlined_call_operand.hbm [shape: f32[64,128], index: 0, kind: input, shape index: {}]
  %s1 = inlined_call_operand.hbm [shape: f32[128,512], index: 1, kind: input, shape index: {}]
  %s2 = inlined_call_operand.vmem [shape: f32[1,512], index: 2, kind: input, shape index: {}]
  %s3 = inlined_call_operand.hbm [shape: f32[64,512], index: 3, kind: output, shape index: {}]
  %s4 = sld [smem:[#allocation0]]
  $region30: #{tpu_custom_call.1} parent=0
    _
  %s6 = ssub.s32 1, %s4
  %s7 = scalar_select 0, %s6, %s4
  $region1: #{tpu_custom_call.1} parent=0
    #allocation2 [shape = 'u8[32768]{0}', space=vmem, size = 0x8000, scoped, tag = 'input window, operand 0, single buffered']
    #allocation3 [shape = 's32[1]{0}', space=sflag, size = 0x4, scoped, tag = 'scoped memory for tpu_custom_call.1']
    #allocation4 [shape = 's32[1]{0}', space=sflag, size = 0x4, scoped, tag = 'scoped memory for tpu_custom_call.1']
    #allocation5 [shape = 'u8[262144]{0}', space=vmem, size = 0x40000, scoped, tag = 'input window, operand 1, single buffered']
    #allocation6 [shape = 's32[1]{0}', space=sflag, size = 0x4, scoped, tag = 'scoped memory for tpu_custom_call.1']
    #allocation7 [shape = 'u8[131072]{0}', space=vmem, size = 0x20000, scoped, tag = 'output window, operand 0, single buffered']
    %8 = vsyncpa [#allocation3], 0
    %9 = vsyncpa [#allocation6], 0
    %10 = vsyncpa [#allocation4], 0
    // Predicated region
    $region2: #{tpu_custom_call.1} parent=1 // pred_check
      _
    $region3: #{tpu_custom_call.1} parent=1 // pred_check_branch
      %12 = sbr.rel (0) target = $region5
    $region4: #{tpu_custom_call.1} parent=1 // pred_region
      %s14 = ssub.s32 1024, 1024
      %15 = vsyncadd [#allocation3], %s14
      %s16 = sshll.u32 [#allocation2], 4
      %s17 = int_to_ptr.vmem [resolvable:$true] %s16
      %22 = dma.hbm_to_vmem [thread:$0]  %s0, 1024, %s17, [#allocation3], 128, 128, 8
    $region5: #{tpu_custom_call.1} parent=1 // pred_fallthru
      _
    // Predicated region
    $region6: #{tpu_custom_call.1} parent=1 // pred_check
      _
    $region7: #{tpu_custom_call.1} parent=1 // pred_check_branch
      %24 = sbr.rel (0) target = $region9
    $region8: #{tpu_custom_call.1} parent=1 // pred_region
      %s26 = ssub.s32 8192, 8192
      %27 = vsyncadd [#allocation6], %s26
      %s28 = sshll.u32 [#allocation5], 4
      %s29 = int_to_ptr.vmem [resolvable:$true] %s28
      %34 = dma.hbm_to_vmem [thread:$0]  %s1, 8192, %s29, [#allocation6], 512, 512, 32
    $region9: #{tpu_custom_call.1} parent=1 // pred_fallthru
      _
    // Predicated region
    $region10: #{tpu_custom_call.1} parent=1 // pred_check
      _
    $region11: #{tpu_custom_call.1} parent=1 // pred_check_branch
      %36 = sbr.rel (0) target = $region13
    $region12: #{tpu_custom_call.1} parent=1 // pred_region
      _
    $region13: #{tpu_custom_call.1} parent=1 // pred_fallthru
      _
    // Predicated region
    $region14: #{tpu_custom_call.1} parent=1 // pred_check
      _
    $region15: #{tpu_custom_call.1} parent=1 // pred_check_branch
      %38 = sbr.rel (0) target = $region17
    $region16: #{tpu_custom_call.1} parent=1 // pred_region
      %39 = dma.done [#allocation3], 1024
    $region17: #{tpu_custom_call.1} parent=1 // pred_fallthru
      _
    // Predicated region
    $region18: #{tpu_custom_call.1} parent=1 // pred_check
      _
    $region19: #{tpu_custom_call.1} parent=1 // pred_check_branch
      %41 = sbr.rel (0) target = $region21
    $region20: #{tpu_custom_call.1} parent=1 // pred_region
      %42 = dma.done [#allocation6], 8192
    $region21: #{tpu_custom_call.1} parent=1 // pred_fallthru
      _
    %v43 = vld [vmem:[#allocation2] sm:$0xff]
    %v44 = vld [vmem:[#allocation2 + $0x8] sm:$0xff]
    %v45 = vld [vmem:[#allocation2 + $0x10] sm:$0xff]
    %v46 = vld [vmem:[#allocation2 + $0x18] sm:$0xff]
    %v47 = vld [vmem:[#allocation2 + $0x20] sm:$0xff]
    %v48 = vld [vmem:[#allocation2 + $0x28] sm:$0xff]
    %v49 = vld [vmem:[#allocation2 + $0x30] sm:$0xff]
    %v50 = vld [vmem:[#allocation2 + $0x38] sm:$0xff]
    %v51 = vld [vmem:[#allocation5] sm:$0xff]
    %v52 = vld [vmem:[#allocation5 + $0x8] sm:$0xff]
    %v53 = vld [vmem:[#allocation5 + $0x10] sm:$0xff]
    %v54 = vld [vmem:[#allocation5 + $0x18] sm:$0xff]
    %v55 = vld [vmem:[#allocation5 + $0x20] sm:$0xff]
    %v56 = vld [vmem:[#allocation5 + $0x28] sm:$0xff]
    %v57 = vld [vmem:[#allocation5 + $0x30] sm:$0xff]
    %v58 = vld [vmem:[#allocation5 + $0x38] sm:$0xff]
    %v59 = vld [vmem:[#allocation5 + $0x40] sm:$0xff]
    %v60 = vld [vmem:[#allocation5 + $0x48] sm:$0xff]
    %v61 = vld [vmem:[#allocation5 + $0x50] sm:$0xff]
    %v62 = vld [vmem:[#allocation5 + $0x58] sm:$0xff]
    %v63 = vld [vmem:[#allocation5 + $0x60] sm:$0xff]
    %v64 = vld [vmem:[#allocation5 + $0x68] sm:$0xff]
    %v65 = vld [vmem:[#allocation5 + $0x70] sm:$0xff]
    %v66 = vld [vmem:[#allocation5 + $0x78] sm:$0xff]
    %v67 = vld [vmem:[#allocation5 + $0x80] sm:$0xff]
    %v68 = vld [vmem:[#allocation5 + $0x88] sm:$0xff]
    %v69 = vld [vmem:[#allocation5 + $0x90] sm:$0xff]
    %v70 = vld [vmem:[#allocation5 + $0x98] sm:$0xff]
    %v71 = vld [vmem:[#allocation5 + $0xa0] sm:$0xff]
    %v72 = vld [vmem:[#allocation5 + $0xa8] sm:$0xff]
    %v73 = vld [vmem:[#allocation5 + $0xb0] sm:$0xff]
    %v74 = vld [vmem:[#allocation5 + $0xb8] sm:$0xff]
    %v75 = vld [vmem:[#allocation5 + $0xc0] sm:$0xff]
    %v76 = vld [vmem:[#allocation5 + $0xc8] sm:$0xff]
    %v77 = vld [vmem:[#allocation5 + $0xd0] sm:$0xff]
    %v78 = vld [vmem:[#allocation5 + $0xd8] sm:$0xff]
    %v79 = vld [vmem:[#allocation5 + $0xe0] sm:$0xff]
    %v80 = vld [vmem:[#allocation5 + $0xe8] sm:$0xff]
    %v81 = vld [vmem:[#allocation5 + $0xf0] sm:$0xff]
    %v82 = vld [vmem:[#allocation5 + $0xf8] sm:$0xff]
    %v83 = vld [vmem:[#allocation5 + $0x100] sm:$0xff]
    %v84 = vld [vmem:[#allocation5 + $0x108] sm:$0xff]
    %v85 = vld [vmem:[#allocation5 + $0x110] sm:$0xff]
    %v86 = vld [vmem:[#allocation5 + $0x118] sm:$0xff]
    %v87 = vld [vmem:[#allocation5 + $0x120] sm:$0xff]
    %v88 = vld [vmem:[#allocation5 + $0x128] sm:$0xff]
    %v89 = vld [vmem:[#allocation5 + $0x130] sm:$0xff]
    %v90 = vld [vmem:[#allocation5 + $0x138] sm:$0xff]
    %v91 = vld [vmem:[#allocation5 + $0x140] sm:$0xff]
    %v92 = vld [vmem:[#allocation5 + $0x148] sm:$0xff]
    %v93 = vld [vmem:[#allocation5 + $0x150] sm:$0xff]
    %v94 = vld [vmem:[#allocation5 + $0x158] sm:$0xff]
    %v95 = vld [vmem:[#allocation5 + $0x160] sm:$0xff]
    %v96 = vld [vmem:[#allocation5 + $0x168] sm:$0xff]
    %v97 = vld [vmem:[#allocation5 + $0x170] sm:$0xff]
    %v98 = vld [vmem:[#allocation5 + $0x178] sm:$0xff]
    %v99 = vld [vmem:[#allocation5 + $0x180] sm:$0xff]
    %v100 = vld [vmem:[#allocation5 + $0x188] sm:$0xff]
    %v101 = vld [vmem:[#allocation5 + $0x190] sm:$0xff]
    %v102 = vld [vmem:[#allocation5 + $0x198] sm:$0xff]
    %v103 = vld [vmem:[#allocation5 + $0x1a0] sm:$0xff]
    %v104 = vld [vmem:[#allocation5 + $0x1a8] sm:$0xff]
    %v105 = vld [vmem:[#allocation5 + $0x1b0] sm:$0xff]
    %v106 = vld [vmem:[#allocation5 + $0x1b8] sm:$0xff]
    %v107 = vld [vmem:[#allocation5 + $0x1c0] sm:$0xff]
    %v108 = vld [vmem:[#allocation5 + $0x1c8] sm:$0xff]
    %v109 = vld [vmem:[#allocation5 + $0x1d0] sm:$0xff]
    %v110 = vld [vmem:[#allocation5 + $0x1d8] sm:$0xff]
    %v111 = vld [vmem:[#allocation5 + $0x1e0] sm:$0xff]
    %v112 = vld [vmem:[#allocation5 + $0x1e8] sm:$0xff]
    %v113 = vld [vmem:[#allocation5 + $0x1f0] sm:$0xff]
    %v114 = vld [vmem:[#allocation5 + $0x1f8] sm:$0xff]
    %v115 = vld [vmem:[%s2] sm:$0xf]
    %v117 = vlaneseq
    %v118 = vshrl.u32 %v117, 7
    %v119 = vsub.s32 0, %v118
    %v120 = vrot.slane %v115, %v119
    %v121 = vlaneseq
    %v122 = vshrl.u32 %v121, 7
    %v123 = vsub.s32 1, %v122
    %v124 = vrot.slane %v115, %v123
    %v125 = vlaneseq
    %v126 = vshrl.u32 %v125, 7
    %v127 = vsub.s32 2, %v126
    %v128 = vrot.slane %v115, %v127
    %v129 = vlaneseq
    %v130 = vshrl.u32 %v129, 7
    %v131 = vsub.s32 3, %v130
    %v132 = vrot.slane %v115, %v131
    %137 = vmatprep.subr.mxu0 %v52
    %138 = vmatpush1.msra.mxu0 %v51
    %139 = vmatprep.subr.mxu0 %v56
    %140 = vmatpush1.msra.mxu0 %v55
    %141 = vmatprep.subr.mxu0 %v60
    %142 = vmatpush1.msra.mxu0 %v59
    %143 = vmatprep.subr.mxu0 %v64
    %144 = vmatpush1.msra.mxu0 %v63
    %145 = vmatprep.subr.mxu0 %v68
    %146 = vmatpush1.msra.mxu0 %v67
    %147 = vmatprep.subr.mxu0 %v72
    %148 = vmatpush1.msra.mxu0 %v71
    %149 = vmatprep.subr.mxu0 %v76
    %150 = vmatpush1.msra.mxu0 %v75
    %151 = vmatprep.subr.mxu0 %v80
    %152 = vmatpush1.msra.mxu0 %v79
    %153 = vmatprep.subr.mxu0 %v84
    %154 = vmatpush1.msra.mxu0 %v83
    %155 = vmatprep.subr.mxu0 %v88
    %156 = vmatpush1.msra.mxu0 %v87
    %157 = vmatprep.subr.mxu0 %v92
    %158 = vmatpush1.msra.mxu0 %v91
    %159 = vmatprep.subr.mxu0 %v96
    %160 = vmatpush1.msra.mxu0 %v95
    %161 = vmatprep.subr.mxu0 %v100
    %162 = vmatpush1.msra.mxu0 %v99
    %163 = vmatprep.subr.mxu0 %v104
    %164 = vmatpush1.msra.mxu0 %v103
    %165 = vmatprep.subr.mxu0 %v108
    %166 = vmatpush1.msra.mxu0 %v107
    %167 = vmatprep.subr.mxu0 %v112
    %168 = vmatpush1.msra.mxu0 %v111
    %169 = vmatprep.subr.mxu0 0.0
    %170 = vmatpush1.msra.mxu0 0.0
    %171 = vmatprep.subr.mxu0 0.0
    %172 = vmatpush1.msra.mxu0 0.0
    %173 = vmatprep.subr.mxu0 0.0
    %174 = vmatpush1.msra.mxu0 0.0
    %175 = vmatprep.subr.mxu0 0.0
    %176 = vmatpush1.msra.mxu0 0.0
    %177 = vmatprep.subr.mxu0 0.0
    %178 = vmatpush1.msra.mxu0 0.0
    %179 = vmatprep.subr.mxu0 0.0
    %180 = vmatpush1.msra.mxu0 0.0
    %181 = vmatprep.subr.mxu0 0.0
    %182 = vmatpush1.msra.mxu0 0.0
    %183 = vmatprep.subr.mxu0 0.0
    %184 = vmatpush1.msra.mxu0 0.0
    %185 = vmatprep.subr.mxu0 0.0
    %186 = vmatpush1.msra.mxu0 0.0
    %187 = vmatprep.subr.mxu0 0.0
    %188 = vmatpush1.msra.mxu0 0.0
    %189 = vmatprep.subr.mxu0 0.0
    %190 = vmatpush1.msra.mxu0 0.0
    %191 = vmatprep.subr.mxu0 0.0
    %192 = vmatpush1.msra.mxu0 0.0
    %193 = vmatprep.subr.mxu0 0.0
    %194 = vmatpush1.msra.mxu0 0.0
    %195 = vmatprep.subr.mxu0 0.0
    %196 = vmatpush1.msra.mxu0 0.0
    %197 = vmatprep.subr.mxu0 0.0
    %198 = vmatpush1.msra.mxu0 0.0
    %199 = vmatprep.subr.mxu0 0.0
    %200 = vmatpush1.msra.mxu0 0.0
    %201 = vmatprep.mubr.f32.mxu0 0.0
    %202 = vmatmul.mubr.f32.gmra.mrb[0].mxu0 %v43
    %v203 = vpop.f32.mrb[0].mxu0
    %v204 = vadd.f32 %v120, %v203
    %v205 = vpop.f32.mrb[0].mxu0
    %v206 = vadd.f32 %v124, %v205
    %207 = vmatprep.mubr.f32.mxu0 0.0
    %208 = vmatmul.mubr.f32.gmra.mrb[0].mxu0 %v44
    %v209 = vpop.f32.mrb[0].mxu0
    %v210 = vadd.f32 %v120, %v209
    %v211 = vpop.f32.mrb[0].mxu0
    %v212 = vadd.f32 %v124, %v211
    %213 = vmatprep.mubr.f32.mxu0 0.0
    %214 = vmatmul.mubr.f32.gmra.mrb[0].mxu0 %v45
    %v215 = vpop.f32.mrb[0].mxu0
    %v216 = vadd.f32 %v120, %v215
    %v217 = vpop.f32.mrb[0].mxu0
    %v218 = vadd.f32 %v124, %v217
    %219 = vmatprep.mubr.f32.mxu0 0.0
    %220 = vmatmul.mubr.f32.gmra.mrb[0].mxu0 %v46
    %v221 = vpop.f32.mrb[0].mxu0
    %v222 = vadd.f32 %v120, %v221
    %v223 = vpop.f32.mrb[0].mxu0
    %v224 = vadd.f32 %v124, %v223
    %225 = vmatprep.mubr.f32.mxu0 0.0
    %226 = vmatmul.mubr.f32.gmra.mrb[0].mxu0 %v47
    %v227 = vpop.f32.mrb[0].mxu0
    %v228 = vadd.f32 %v120, %v227
    %v229 = vpop.f32.mrb[0].mxu0
    %v230 = vadd.f32 %v124, %v229
    %231 = vmatprep.mubr.f32.mxu0 0.0
    %232 = vmatmul.mubr.f32.gmra.mrb[0].mxu0 %v48
    %v233 = vpop.f32.mrb[0].mxu0
    %v234 = vadd.f32 %v120, %v233
    %v235 = vpop.f32.mrb[0].mxu0
    %v236 = vadd.f32 %v124, %v235
    %237 = vmatprep.mubr.f32.mxu0 0.0
    %238 = vmatmul.mubr.f32.gmra.mrb[0].mxu0 %v49
    %v239 = vpop.f32.mrb[0].mxu0
    %v240 = vadd.f32 %v120, %v239
    %v241 = vpop.f32.mrb[0].mxu0
    %v242 = vadd.f32 %v124, %v241
    %243 = vmatprep.mubr.f32.mxu0 0.0
    %244 = vmatmul.mubr.f32.gmra.mrb[0].mxu0 %v50
    %v245 = vpop.f32.mrb[0].mxu0
    %v246 = vadd.f32 %v120, %v245
    %v247 = vpop.f32.mrb[0].mxu0
    %v248 = vadd.f32 %v124, %v247
    %249 = vdwg.mxu0
    %250 = vmatprep.subr.mxu0 %v54
    %251 = vmatpush1.msra.mxu0 %v53
    %252 = vmatprep.subr.mxu0 %v58
    %253 = vmatpush1.msra.mxu0 %v57
    %254 = vmatprep.subr.mxu0 %v62
    %255 = vmatpush1.msra.mxu0 %v61
    %256 = vmatprep.subr.mxu0 %v66
    %257 = vmatpush1.msra.mxu0 %v65
    %258 = vmatprep.subr.mxu0 %v70
    %259 = vmatpush1.msra.mxu0 %v69
    %260 = vmatprep.subr.mxu0 %v74
    %261 = vmatpush1.msra.mxu0 %v73
    %262 = vmatprep.subr.mxu0 %v78
    %263 = vmatpush1.msra.mxu0 %v77
    %264 = vmatprep.subr.mxu0 %v82
    %265 = vmatpush1.msra.mxu0 %v81
    %266 = vmatprep.subr.mxu0 %v86
    %267 = vmatpush1.msra.mxu0 %v85
    %268 = vmatprep.subr.mxu0 %v90
    %269 = vmatpush1.msra.mxu0 %v89
    %270 = vmatprep.subr.mxu0 %v94
    %271 = vmatpush1.msra.mxu0 %v93
    %272 = vmatprep.subr.mxu0 %v98
    %273 = vmatpush1.msra.mxu0 %v97
    %274 = vmatprep.subr.mxu0 %v102
    %275 = vmatpush1.msra.mxu0 %v101
    %276 = vmatprep.subr.mxu0 %v106
    %277 = vmatpush1.msra.mxu0 %v105
    %278 = vmatprep.subr.mxu0 %v110
    %279 = vmatpush1.msra.mxu0 %v109
    %280 = vmatprep.subr.mxu0 %v114
    %281 = vmatpush1.msra.mxu0 %v113
    %282 = vmatprep.subr.mxu0 0.0
    %283 = vmatpush1.msra.mxu0 0.0
    %284 = vmatprep.subr.mxu0 0.0
    %285 = vmatpush1.msra.mxu0 0.0
    %286 = vmatprep.subr.mxu0 0.0
    %287 = vmatpush1.msra.mxu0 0.0
    %288 = vmatprep.subr.mxu0 0.0
    %289 = vmatpush1.msra.mxu0 0.0
    %290 = vmatprep.subr.mxu0 0.0
    %291 = vmatpush1.msra.mxu0 0.0
    %292 = vmatprep.subr.mxu0 0.0
    %293 = vmatpush1.msra.mxu0 0.0
    %294 = vmatprep.subr.mxu0 0.0
    %295 = vmatpush1.msra.mxu0 0.0
    %296 = vmatprep.subr.mxu0 0.0
    %297 = vmatpush1.msra.mxu0 0.0
    %298 = vmatprep.subr.mxu0 0.0
    %299 = vmatpush1.msra.mxu0 0.0
    %300 = vmatprep.subr.mxu0 0.0
    %301 = vmatpush1.msra.mxu0 0.0
    %302 = vmatprep.subr.mxu0 0.0
    %303 = vmatpush1.msra.mxu0 0.0
    %304 = vmatprep.subr.mxu0 0.0
    %305 = vmatpush1.msra.mxu0 0.0
    %306 = vmatprep.subr.mxu0 0.0
    %307 = vmatpush1.msra.mxu0 0.0
    %308 = vmatprep.subr.mxu0 0.0
    %309 = vmatpush1.msra.mxu0 0.0
    %310 = vmatprep.subr.mxu0 0.0
    %311 = vmatpush1.msra.mxu0 0.0
    %312 = vmatprep.subr.mxu0 0.0
    %313 = vmatpush1.msra.mxu0 0.0
    %314 = vmatprep.mubr.f32.mxu0 0.0
    %315 = vmatmul.mubr.f32.gmra.mrb[0].mxu0 %v43
    %v316 = vpop.f32.mrb[0].mxu0
    %v317 = vadd.f32 %v128, %v316
    %v318 = vpop.f32.mrb[0].mxu0
    %v319 = vadd.f32 %v132, %v318
    %320 = vmatprep.mubr.f32.mxu0 0.0
    %321 = vmatmul.mubr.f32.gmra.mrb[0].mxu0 %v44
    %v322 = vpop.f32.mrb[0].mxu0
    %v323 = vadd.f32 %v128, %v322
    %v324 = vpop.f32.mrb[0].mxu0
    %v325 = vadd.f32 %v132, %v324
    %326 = vmatprep.mubr.f32.mxu0 0.0
    %327 = vmatmul.mubr.f32.gmra.mrb[0].mxu0 %v45
    %v328 = vpop.f32.mrb[0].mxu0
    %v329 = vadd.f32 %v128, %v328
    %v330 = vpop.f32.mrb[0].mxu0
    %v331 = vadd.f32 %v132, %v330
    %332 = vmatprep.mubr.f32.mxu0 0.0
    %333 = vmatmul.mubr.f32.gmra.mrb[0].mxu0 %v46
    %v334 = vpop.f32.mrb[0].mxu0
    %v335 = vadd.f32 %v128, %v334
    %v336 = vpop.f32.mrb[0].mxu0
    %v337 = vadd.f32 %v132, %v336
    %338 = vmatprep.mubr.f32.mxu0 0.0
    %339 = vmatmul.mubr.f32.gmra.mrb[0].mxu0 %v47
    %v340 = vpop.f32.mrb[0].mxu0
    %v341 = vadd.f32 %v128, %v340
    %v342 = vpop.f32.mrb[0].mxu0
    %v343 = vadd.f32 %v132, %v342
    %344 = vmatprep.mubr.f32.mxu0 0.0
    %345 = vmatmul.mubr.f32.gmra.mrb[0].mxu0 %v48
    %v346 = vpop.f32.mrb[0].mxu0
    %v347 = vadd.f32 %v128, %v346
    %v348 = vpop.f32.mrb[0].mxu0
    %v349 = vadd.f32 %v132, %v348
    %350 = vmatprep.mubr.f32.mxu0 0.0
    %351 = vmatmul.mubr.f32.gmra.mrb[0].mxu0 %v49
    %v352 = vpop.f32.mrb[0].mxu0
    %v353 = vadd.f32 %v128, %v352
    %v354 = vpop.f32.mrb[0].mxu0
    %v355 = vadd.f32 %v132, %v354
    %356 = vmatprep.mubr.f32.mxu0 0.0
    %357 = vmatmul.mubr.f32.gmra.mrb[0].mxu0 %v50
    %v358 = vpop.f32.mrb[0].mxu0
    %v359 = vadd.f32 %v128, %v358
    %v360 = vpop.f32.mrb[0].mxu0
    %v361 = vadd.f32 %v132, %v360
    %362 = vdwg.mxu0
    %363 = vst [vmem:[#allocation7] sm:$0xff] %v204
    %364 = vst [vmem:[#allocation7 + $0x8] sm:$0xff] %v206
    %365 = vst [vmem:[#allocation7 + $0x10] sm:$0xff] %v317
    %366 = vst [vmem:[#allocation7 + $0x18] sm:$0xff] %v319
    %367 = vst [vmem:[#allocation7 + $0x20] sm:$0xff] %v210
    %368 = vst [vmem:[#allocation7 + $0x28] sm:$0xff] %v212
    %369 = vst [vmem:[#allocation7 + $0x30] sm:$0xff] %v323
    %370 = vst [vmem:[#allocation7 + $0x38] sm:$0xff] %v325
    %371 = vst [vmem:[#allocation7 + $0x40] sm:$0xff] %v216
    %372 = vst [vmem:[#allocation7 + $0x48] sm:$0xff] %v218
    %373 = vst [vmem:[#allocation7 + $0x50] sm:$0xff] %v329
    %374 = vst [vmem:[#allocation7 + $0x58] sm:$0xff] %v331
    %375 = vst [vmem:[#allocation7 + $0x60] sm:$0xff] %v222
    %376 = vst [vmem:[#allocation7 + $0x68] sm:$0xff] %v224
    %377 = vst [vmem:[#allocation7 + $0x70] sm:$0xff] %v335
    %378 = vst [vmem:[#allocation7 + $0x78] sm:$0xff] %v337
    %379 = vst [vmem:[#allocation7 + $0x80] sm:$0xff] %v228
    %380 = vst [vmem:[#allocation7 + $0x88] sm:$0xff] %v230
    %381 = vst [vmem:[#allocation7 + $0x90] sm:$0xff] %v341
    %382 = vst [vmem:[#allocation7 + $0x98] sm:$0xff] %v343
    %383 = vst [vmem:[#allocation7 + $0xa0] sm:$0xff] %v234
    %384 = vst [vmem:[#allocation7 + $0xa8] sm:$0xff] %v236
    %385 = vst [vmem:[#allocation7 + $0xb0] sm:$0xff] %v347
    %386 = vst [vmem:[#allocation7 + $0xb8] sm:$0xff] %v349
    %387 = vst [vmem:[#allocation7 + $0xc0] sm:$0xff] %v240
    %388 = vst [vmem:[#allocation7 + $0xc8] sm:$0xff] %v242
    %389 = vst [vmem:[#allocation7 + $0xd0] sm:$0xff] %v353
    %390 = vst [vmem:[#allocation7 + $0xd8] sm:$0xff] %v355
    %391 = vst [vmem:[#allocation7 + $0xe0] sm:$0xff] %v246
    %392 = vst [vmem:[#allocation7 + $0xe8] sm:$0xff] %v248
    %393 = vst [vmem:[#allocation7 + $0xf0] sm:$0xff] %v359
    %394 = vst [vmem:[#allocation7 + $0xf8] sm:$0xff] %v361
    // Predicated region
    $region22: #{tpu_custom_call.1} parent=1 // pred_check
      _
    $region23: #{tpu_custom_call.1} parent=1 // pred_check_branch
      %396 = sbr.rel (0) target = $region25
    $region24: #{tpu_custom_call.1} parent=1 // pred_region
      %s398 = ssub.s32 4096, 4096
      %399 = vsyncadd [#allocation4], %s398
      %s400 = sshll.u32 [#allocation7], 4
      %s401 = int_to_ptr.vmem [resolvable:$true] %s400
      %406 = dma.vmem_to_hbm [thread:$0]  %s401, 4096, %s3, [#allocation4], 512, 512, 32
    $region25: #{tpu_custom_call.1} parent=1 // pred_fallthru
      _
    // Predicated region
    $region26: #{tpu_custom_call.1} parent=1 // pred_check
      _
    $region27: #{tpu_custom_call.1} parent=1 // pred_check_branch
      %408 = sbr.rel (0) target = $region29
    $region28: #{tpu_custom_call.1} parent=1 // pred_region
      %409 = dma.done [#allocation4], 4096
    $region29: #{tpu_custom_call.1} parent=1 // pred_fallthru
      _
    %410 = vsyncpa [#allocation3], 1
    %411 = vsyncpa [#allocation6], 1
    %412 = vsyncpa [#allocation4], 1

</llo_original>
